<compile_context>
chip_gen: v5e
topology: v5e:2x2
jax: 0.10.0
libtpu: 0.0.40
codegen_flags: <defaults>
</compile_context>

<pallas_src>
import functools

import jax
import jax.numpy as jnp
from jax.experimental import pallas as pl
from jax.experimental.pallas import tpu as pltpu

_LANE = 128
_UNROLL_C_MAX = 32   # python-unrolled channel loop up to this many channels


def _min_sublane(dtype):
    """Minimum legal sublane tile for the dtype: 8 (f32), 16 (bf16/f16), 32 (8-bit)."""
    bits = jnp.dtype(dtype).itemsize * 8
    if bits >= 32:
        return 8
    if bits == 16:
        return 16
    return 32


def _tpu_params():
    """(vmem_capacity_bytes, num_tensorcores) with conservative fallbacks."""
    vmem_cap = 128 << 20
    num_cores = 1
    try:
        info = pltpu.get_tpu_info()
        cap = getattr(info, "vmem_capacity_bytes", None)
        if cap:
            vmem_cap = int(cap)
        for attr in ("num_cores", "core_count", "tensorcore_count", "num_tensorcores"):
            v = getattr(info, attr, None)
            if v:
                num_cores = int(v)
                break
    except Exception:
        pass
    try:
        kind = jax.devices()[0].device_kind.lower()
        if "v7" in kind:
            vmem_cap = min(vmem_cap, 64 << 20)
            num_cores = max(num_cores, 2)
        elif "v4" in kind or "v5p" in kind:
            num_cores = max(num_cores, 2)
    except Exception:
        pass
    return vmem_cap, num_cores


def _block_bytes(tile_b, C, tile_s, itemsize, unroll_channels):
    """VMEM bytes for one grid step: in + out double-buffered + in-kernel temporaries."""
    elems = tile_b * C * tile_s * _LANE
    io = 4 * elems * itemsize                        # (in + out) x double-buffer
    spatial_f32 = tile_b * tile_s * _LANE * 4        # acc / root / inv temporaries
    temps = 4 * spatial_f32 + elems * itemsize       # + product tile before the store
    if not unroll_channels:
        temps += 2 * elems * 4                       # f32 upcast + xp full-tile temps
    return io + temps


def _pick_tiles(B, C, S, itemsize, min_sub, budget, vmem_cap, num_cores,
                unroll_channels):
    per_row = _block_bytes(1, C, 1, itemsize, unroll_channels)

    # Fail loudly if even the minimum legal block cannot fit (e.g. huge C on v7x).
    min_rows = min(S, min_sub)
    if per_row * min_rows > vmem_cap - (8 << 20):
        # TODO(synk): split-C two-pass kernel (sum-of-powers pass, then scale pass).
        raise NotImplementedError(
            f"Normalize: C={C} too large for a single-pass kernel on this TPU "
            f"generation (needs ~{per_row * min_rows} bytes of VMEM).")

    rows_cap = max(1, budget // per_row)
    if rows_cap >= S:
        tile_s = S                                   # full extent: always legal
    else:
        tile_s = max(min_sub, (rows_cap // min_sub) * min_sub)
        tile_s = min(tile_s, S)                      # == S (full dim) stays legal

    # Batch blocking: only when the full spatial extent already fits in one block,
    # so grid steps over tiny feature maps still move a decent amount of data.
    tile_b = 1
    if tile_s == S and B > 1:
        per_batch = _block_bytes(1, C, S, itemsize, unroll_channels)
        tile_b = max(1, min(B, budget // max(1, per_batch)))

    # Keep >= num_cores grid blocks on multi-TensorCore parts (v7x / megacore) when
    # there is enough work to split; single-TC v5e/v6e keep the largest legal tile.
    if num_cores > 1:
        if tile_b > 1 and B >= num_cores:
            tile_b = min(tile_b, -(-B // num_cores))
        nb = -(-B // tile_b)
        ns = -(-S // tile_s)
        if nb * ns < num_cores and tile_s > min_sub:
            tgt = -(-S // num_cores)
            tile_s = min(S, max(min_sub, -(-tgt // min_sub) * min_sub))

    return tile_b, tile_s


def _normalize_kernel(x_ref, o_ref, *, power, eps, approx, unroll_channels):
    # x_ref / o_ref: (TILE_B, C, TILE_S, 128); reduction over axis 1 (channels).
    n_channels = x_ref.shape[1]

    def _pow(v):
        return v * v if power == 2 else v ** power

    if unroll_channels:
        # Per-channel accumulate: only (TILE_B, TILE_S, 128) f32 temporaries.
        s = _pow(x_ref[:, 0].astype(jnp.float32))
        for c in range(1, n_channels):
            s = s + _pow(x_ref[:, c].astype(jnp.float32))
    else:
        xf = x_ref[...].astype(jnp.float32)
        s = jnp.sum(_pow(xf), axis=1)                # (TILE_B, TILE_S, 128)

    root = jnp.sqrt(s) if power == 2 else s ** (1.0 / power)
    inv = pl.reciprocal(root + eps, approx=approx)   # eps OUTSIDE the root (torch)
    if o_ref.dtype != jnp.float32:
        inv = inv.astype(o_ref.dtype)                # multiply in the I/O dtype
    o_ref[...] = (x_ref[...] * inv[:, None]).astype(o_ref.dtype)


def normalize(x, power=2, eps=1e-7, *, approx_reciprocal=False,
              block_budget_bytes=None):
    """Lp-normalize `x` over axis 1 (channel axis). x: (B, C, *spatial), e.g. NCHW."""
    if x.ndim < 2:
        raise ValueError("Normalize expects at least (batch, channel, ...) dims")
    orig_shape = x.shape
    B, C = orig_shape[0], orig_shape[1]
    hw = 1
    for d in orig_shape[2:]:
        hw *= d
    itemsize = jnp.dtype(x.dtype).itemsize
    min_sub = _min_sublane(x.dtype)
    unroll_channels = C <= _UNROLL_C_MAX

    vmem_cap, num_cores = _tpu_params()
    if block_budget_bytes is None:
        # Conservative on 64 MiB (v7x) parts; generous on 128 MiB (v5e/v6e) parts.
        block_budget_bytes = (16 << 20) if vmem_cap <= (80 << 20) else (48 << 20)

    S = -(-hw // _LANE)                              # ceil(hw / 128): sublane rows
    hw_lane = S * _LANE

    tile_b, tile_s = _pick_tiles(B, C, S, itemsize, min_sub, block_budget_bytes,
                                 vmem_cap, num_cores, unroll_channels)

    # Pad only to the lane multiple when H*W is ragged; no tile-multiple padding
    # (partial trailing batch/spatial blocks are masked by Pallas).
    xr = x.reshape(B, C, hw)
    if hw_lane != hw:
        # TODO(synk): CompilerParams(allow_input_fusion=...) could fuse this pad into
        # the input DMA and drop one HBM round trip for ragged shapes.
        xr = jnp.pad(xr, ((0, 0), (0, 0), (0, hw_lane - hw)))
    xr = xr.reshape(B, C, S, _LANE)

    block = (tile_b, C, tile_s, _LANE)
    index_map = lambda i, j: (i, 0, j, 0)
    grid = (pl.cdiv(B, tile_b), pl.cdiv(S, tile_s))

    block_bytes = _block_bytes(tile_b, C, tile_s, itemsize, unroll_channels)
    vmem_limit = int(min(max(block_bytes + (2 << 20), 8 << 20),
                         vmem_cap - (8 << 20)))

    cost = pl.CostEstimate(
        flops=3 * B * C * hw_lane,
        transcendentals=2 * B * hw_lane,
        bytes_accessed=2 * B * C * hw_lane * itemsize,
    )

    out = pl.pallas_call(
        functools.partial(_normalize_kernel, power=power, eps=eps,
                          approx=approx_reciprocal,
                          unroll_channels=unroll_channels),
        out_shape=jax.ShapeDtypeStruct((B, C, S, _LANE), x.dtype),
        grid_spec=pltpu.PrefetchScalarGridSpec(
            num_scalar_prefetch=0,
            grid=grid,
            in_specs=[pl.BlockSpec(block, index_map)],
            out_specs=pl.BlockSpec(block, index_map),
        ),
        compiler_params=pltpu.CompilerParams(
            dimension_semantics=("parallel", "parallel"),
            vmem_limit_bytes=vmem_limit),
        cost_estimate=cost,
    )(xr)

    out = out.reshape(B, C, hw_lane)
    if hw_lane != hw:
        out = out[:, :, :hw]
    return out.reshape(orig_shape)


def _normalize_ref(x, power=2, eps=1e-7):
    norm = jnp.power(jnp.sum(jnp.power(x, power), axis=1, keepdims=True), 1.0 / power)
    return x / (norm + eps)


if __name__ == "__main__":
    key = jax.random.PRNGKey(0)
    x = jax.random.normal(key, (2, 4, 16, 16), dtype=jnp.float32)     # NCHW

    out = jax.block_until_ready(normalize(x, power=2))
    ref = _normalize_ref(x, power=2)
    assert out.shape == x.shape and out.dtype == x.dtype
    assert jnp.allclose(out, ref, atol=1e-5, rtol=1e-5), "mismatch vs reference"

    # Ragged spatial extent (H*W not a multiple of 128) exercises the lane-pad path.
    x2 = jax.random.normal(jax.random.PRNGKey(1), (2, 3, 5, 7), dtype=jnp.float32)
    out2 = jax.block_until_ready(normalize(x2, power=2))
    ref2 = _normalize_ref(x2, power=2)
    assert jnp.allclose(out2, ref2, atol=1e-5, rtol=1e-5), "mismatch (ragged) vs ref"

    print("KERNEL_OK")
</pallas_src>

<mosaic_0001>
module attributes {stable_mosaic.version = 11 : i64} {
  func.func @_normalize_kernel(%arg0: i32, %arg1: i32, %arg2: memref<2x4x2x128xf32, #tpu.memory_space<vmem>>, %arg3: memref<2x4x2x128xf32, #tpu.memory_space<vmem>>) attributes {dimension_semantics = [#tpu.dimension_semantics<parallel>, #tpu.dimension_semantics<parallel>], iteration_bounds = array<i64: 1, 1>, scalar_prefetch = 0 : i64, scratch_operands = 0 : i64, tpu.core_type = #tpu.core_type<tc>, window_params = [{transform_indices = @transform_0, window_bounds = array<i64: 2, 4, 2, 128>}, {transform_indices = @transform_1, window_bounds = array<i64: 2, 4, 2, 128>}]} {
    %c0 = arith.constant 0 : index
    %c0_0 = arith.constant 0 : index
    %c0_1 = arith.constant 0 : index
    %c0_2 = arith.constant 0 : index
    %0 = vector.load %arg2[%c0, %c0_0, %c0_1, %c0_2] : memref<2x4x2x128xf32, #tpu.memory_space<vmem>>, vector<2x1x2x128xf32>
    %1 = vector.shape_cast %0 : vector<2x1x2x128xf32> to vector<2x2x128xf32>
    %2 = arith.mulf %1, %1 : vector<2x2x128xf32>
    %c0_3 = arith.constant 0 : index
    %c1 = arith.constant 1 : index
    %c0_4 = arith.constant 0 : index
    %c0_5 = arith.constant 0 : index
    %3 = vector.load %arg2[%c0_3, %c1, %c0_4, %c0_5] : memref<2x4x2x128xf32, #tpu.memory_space<vmem>>, vector<2x1x2x128xf32>
    %4 = vector.shape_cast %3 : vector<2x1x2x128xf32> to vector<2x2x128xf32>
    %5 = arith.mulf %4, %4 : vector<2x2x128xf32>
    %6 = arith.addf %2, %5 : vector<2x2x128xf32>
    %c0_6 = arith.constant 0 : index
    %c2 = arith.constant 2 : index
    %c0_7 = arith.constant 0 : index
    %c0_8 = arith.constant 0 : index
    %7 = vector.load %arg2[%c0_6, %c2, %c0_7, %c0_8] : memref<2x4x2x128xf32, #tpu.memory_space<vmem>>, vector<2x1x2x128xf32>
    %8 = vector.shape_cast %7 : vector<2x1x2x128xf32> to vector<2x2x128xf32>
    %9 = arith.mulf %8, %8 : vector<2x2x128xf32>
    %10 = arith.addf %6, %9 : vector<2x2x128xf32>
    %c0_9 = arith.constant 0 : index
    %c3 = arith.constant 3 : index
    %c0_10 = arith.constant 0 : index
    %c0_11 = arith.constant 0 : index
    %11 = vector.load %arg2[%c0_9, %c3, %c0_10, %c0_11] : memref<2x4x2x128xf32, #tpu.memory_space<vmem>>, vector<2x1x2x128xf32>
    %12 = vector.shape_cast %11 : vector<2x1x2x128xf32> to vector<2x2x128xf32>
    %13 = arith.mulf %12, %12 : vector<2x2x128xf32>
    %14 = arith.addf %10, %13 : vector<2x2x128xf32>
    %15 = math.sqrt %14 : vector<2x2x128xf32>
    %cst = arith.constant 1.000000e-07 : f32
    %16 = vector.broadcast %cst : f32 to vector<2x2x128xf32>
    %17 = arith.addf %15, %16 : vector<2x2x128xf32>
    %18 = tpu.reciprocal %17 : vector<2x2x128xf32> -> vector<2x2x128xf32>
    %c0_12 = arith.constant 0 : index
    %c0_13 = arith.constant 0 : index
    %c0_14 = arith.constant 0 : index
    %c0_15 = arith.constant 0 : index
    %19 = vector.load %arg2[%c0_12, %c0_13, %c0_14, %c0_15] : memref<2x4x2x128xf32, #tpu.memory_space<vmem>>, vector<2x4x2x128xf32>
    %20 = vector.shape_cast %18 : vector<2x2x128xf32> to vector<2x1x2x128xf32>
    %21 = vector.broadcast %20 : vector<2x1x2x128xf32> to vector<2x4x2x128xf32>
    %22 = arith.mulf %19, %21 : vector<2x4x2x128xf32>
    %c0_16 = arith.constant 0 : index
    %c0_17 = arith.constant 0 : index
    %c0_18 = arith.constant 0 : index
    %c0_19 = arith.constant 0 : index
    %23 = vector.load %arg3[%c0_16, %c0_17, %c0_18, %c0_19] : memref<2x4x2x128xf32, #tpu.memory_space<vmem>>, vector<2x4x2x128xf32>
    tpu.vector_store %arg3[%c0_16, %c0_17, %c0_18, %c0_19], %22 {strides = array<i32>} : memref<2x4x2x128xf32, #tpu.memory_space<vmem>>, vector<2x4x2x128xf32>,
    return
  }
  func.func @transform_0(%arg0: i32, %arg1: i32) -> (i32, i32, i32, i32) {
    %c0_i32 = arith.constant 0 : i32
    %c0_i32_0 = arith.constant 0 : i32
    %c0_i32_1 = arith.constant 0 : i32
    return %arg0, %c0_i32, %arg1, %c0_i32_0 : i32, i32, i32, i32
  }
  func.func @transform_1(%arg0: i32, %arg1: i32) -> (i32, i32, i32, i32) {
    %c0_i32 = arith.constant 0 : i32
    %c0_i32_0 = arith.constant 0 : i32
    %c0_i32_1 = arith.constant 0 : i32
    return %arg0, %c0_i32, %arg1, %c0_i32_0 : i32, i32, i32, i32
  }
}

</mosaic_0001>

<llo_original>
// kernel: tpu_custom_call.1
$region0: #{tpu_custom_call.1}
  #allocation0 [shape = 'u32[]', space=smem, size = 0x4, offset = 0x4, fixed_abs, tag = 'smem constant byte address 0x4 - core index']
  #allocation1 [shape = 'u32[72,128]{1,0:T(1,128)}', space=vmem, size = 0x9000, scoped, tag = 'internal scratch']
  %s0 = inlined_call_operand.hbm [shape: f32[2,4,2,128], index: 0, kind: input, shape index: {}]
  %s1 = inlined_call_operand.hbm [shape: f32[2,4,2,128], index: 1, kind: output, shape index: {}]
  %s2 = sld [smem:[#allocation0]]
  $region18: #{tpu_custom_call.1} parent=0
    _
  %s4 = ssub.s32 1, %s2
  %s5 = scalar_select 0, %s4, %s2
  $region1: #{tpu_custom_call.1} parent=0
    #allocation2 [shape = 'u8[8192]{0}', space=vmem, size = 0x2000, scoped, tag = 'input window, operand 0, single buffered']
    #allocation3 [shape = 's32[1]{0}', space=sflag, size = 0x4, scoped, tag = 'scoped memory for tpu_custom_call.1']
    #allocation4 [shape = 's32[1]{0}', space=sflag, size = 0x4, scoped, tag = 'scoped memory for tpu_custom_call.1']
    #allocation5 [shape = 'u8[8192]{0}', space=vmem, size = 0x2000, scoped, tag = 'output window, operand 0, single buffered']
    %6 = vsyncpa [#allocation3], 0
    %7 = vsyncpa [#allocation4], 0
    // Predicated region
    $region2: #{tpu_custom_call.1} parent=1 // pred_check
      _
    $region3: #{tpu_custom_call.1} parent=1 // pred_check_branch
      %9 = sbr.rel (0) target = $region5
    $region4: #{tpu_custom_call.1} parent=1 // pred_region
      %11 = vsyncadd [#allocation3], 0
      %s12 = sshll.u32 %s0, 4
      %s13 = int_to_ptr.hbm [resolvable:$true] %s12
      %s14 = sshll.u32 [#allocation2], 4
      %s15 = int_to_ptr.vmem [resolvable:$true] %s14
      %20 = dma.hbm_to_vmem [thread:$0]  %s13, 256, %s15, [#allocation3], 32, 32, 2
    $region5: #{tpu_custom_call.1} parent=1 // pred_fallthru
      _
    // Predicated region
    $region6: #{tpu_custom_call.1} parent=1 // pred_check
      _
    $region7: #{tpu_custom_call.1} parent=1 // pred_check_branch
      %22 = sbr.rel (0) target = $region9
    $region8: #{tpu_custom_call.1} parent=1 // pred_region
      %24 = dma.done [#allocation3], 256
    $region9: #{tpu_custom_call.1} parent=1 // pred_fallthru
      _
    %v25 = vld [vmem:[#allocation2] sm:$0x3]
    %v26 = vld [vmem:[#allocation2 + $0x8] sm:$0x3]
    %v27 = vmul.f32 %v25, %v25
    %v28 = vmul.f32 %v26, %v26
    %s29 = scalar_lea.vmem [#allocation2], 2
    %v30 = vld [vmem:[%s29] sm:$0x3]
    %v31 = vld [vmem:[%s29 + $0x8] sm:$0x3]
    %v32 = vmul.f32 %v30, %v30
    %v33 = vmul.f32 %v31, %v31
    %v34 = vadd.f32 %v27, %v32
    %v35 = vadd.f32 %v28, %v33
    %s36 = scalar_lea.vmem [#allocation2], 4
    %v37 = vld [vmem:[%s36] sm:$0x3]
    %v38 = vld [vmem:[%s36 + $0x8] sm:$0x3]
    %v39 = vmul.f32 %v37, %v37
    %v40 = vmul.f32 %v38, %v38
    %v41 = vadd.f32 %v34, %v39
    %v42 = vadd.f32 %v35, %v40
    %s43 = scalar_lea.vmem [#allocation2], 6
    %v44 = vld [vmem:[%s43] sm:$0x3]
    %v45 = vld [vmem:[%s43 + $0x8] sm:$0x3]
    %v46 = vmul.f32 %v44, %v44
    %v47 = vmul.f32 %v45, %v45
    %v48 = vadd.f32 %v41, %v46
    %v49 = vadd.f32 %v42, %v47
    %v50 = vrsqrt.pop %v48
    %v51 = vmul.f32 %v50, %v48
    %v52 = vmul.f32 %v51, %v50
    %v53 = vmul.f32 0.5, %v52
    %v54 = vsub.f32 1.5, %v53
    %v55 = vmul.f32 %v50, %v54
    %v56 = vmul.f32 %v48, %v55
    %vm57 = vcmp.eq.f32.partialorder %v48, inf
    %v58 = vsel %vm57, %v48, %v56
    %vm59 = vcmp.eq.f32.partialorder %v48, 0.0
    %v60 = vand.u32 %v48, 2147483648
    %v61 = vsel %vm59, %v60, %v58
    %v62 = vrsqrt.pop %v49
    %v63 = vmul.f32 %v62, %v49
    %v64 = vmul.f32 %v63, %v62
    %v65 = vmul.f32 0.5, %v64
    %v66 = vsub.f32 1.5, %v65
    %v67 = vmul.f32 %v62, %v66
    %v68 = vmul.f32 %v49, %v67
    %vm69 = vcmp.eq.f32.partialorder %v49, inf
    %v70 = vsel %vm69, %v49, %v68
    %vm71 = vcmp.eq.f32.partialorder %v49, 0.0
    %v72 = vand.u32 %v49, 2147483648
    %v73 = vsel %vm71, %v72, %v70
    %v74 = vadd.f32 %v61, 1e-07
    %v75 = vadd.f32 %v73, 1e-07
    %v76 = vrcp.pop %v74
    %v77 = vmul.f32 %v74, %v76
    %v78 = vsub.f32 1.0, %v77
    %v79 = vmul.f32 %v76, %v78
    %v80 = vadd.f32 %v76, %v79
    %vm81 = vweird.f32 %v74
    %vm82 = vweird.f32 %v76
    %vm83 = vmor %vm81, %vm82
    %v84 = vsel %vm83, %v76, %v80
    %v85 = vand.u32 2147483647, %v74
    %vm86 = vcmp.eq.f32.partialorder %v85, 8.507059e+37
    %v87 = vand.u32 %v74, 2147483648
    %v88 = vor.u32 1.1754944e-38, %v87
    %v89 = vsel %vm86, %v88, %v84
    %v90 = vrcp.pop %v75
    %v91 = vmul.f32 %v75, %v90
    %v92 = vsub.f32 1.0, %v91
    %v93 = vmul.f32 %v90, %v92
    %v94 = vadd.f32 %v90, %v93
    %vm95 = vweird.f32 %v75
    %vm96 = vweird.f32 %v90
    %vm97 = vmor %vm95, %vm96
    %v98 = vsel %vm97, %v90, %v94
    %v99 = vand.u32 2147483647, %v75
    %vm100 = vcmp.eq.f32.partialorder %v99, 8.507059e+37
    %v101 = vand.u32 %v75, 2147483648
    %v102 = vor.u32 1.1754944e-38, %v101
    %v103 = vsel %vm100, %v102, %v98
    %v104 = vld [vmem:[#allocation2] sm:$0x3]
    %v105 = vld [vmem:[#allocation2 + $0x2] sm:$0x3]
    %v106 = vld [vmem:[#allocation2 + $0x4] sm:$0x3]
    %v107 = vld [vmem:[#allocation2 + $0x6] sm:$0x3]
    %v108 = vld [vmem:[#allocation2 + $0x8] sm:$0x3]
    %v109 = vld [vmem:[#allocation2 + $0xa] sm:$0x3]
    %v110 = vld [vmem:[#allocation2 + $0xc] sm:$0x3]
    %v111 = vld [vmem:[#allocation2 + $0xe] sm:$0x3]
    %v112 = vmul.f32 %v104, %v89
    %v113 = vmul.f32 %v105, %v89
    %v114 = vmul.f32 %v106, %v89
    %v115 = vmul.f32 %v107, %v89
    %v116 = vmul.f32 %v108, %v103
    %v117 = vmul.f32 %v109, %v103
    %v118 = vmul.f32 %v110, %v103
    %v119 = vmul.f32 %v111, %v103
    %120 = vst [vmem:[#allocation5] sm:$0x3] %v112
    %121 = vst [vmem:[#allocation5 + $0x2] sm:$0x3] %v113
    %122 = vst [vmem:[#allocation5 + $0x4] sm:$0x3] %v114
    %123 = vst [vmem:[#allocation5 + $0x6] sm:$0x3] %v115
    %124 = vst [vmem:[#allocation5 + $0x8] sm:$0x3] %v116
    %125 = vst [vmem:[#allocation5 + $0xa] sm:$0x3] %v117
    %126 = vst [vmem:[#allocation5 + $0xc] sm:$0x3] %v118
    %127 = vst [vmem:[#allocation5 + $0xe] sm:$0x3] %v119
    // Predicated region
    $region10: #{tpu_custom_call.1} parent=1 // pred_check
      _
    $region11: #{tpu_custom_call.1} parent=1 // pred_check_branch
      %129 = sbr.rel (0) target = $region13
    $region12: #{tpu_custom_call.1} parent=1 // pred_region
      %131 = vsyncadd [#allocation4], 0
      %s132 = sshll.u32 [#allocation5], 4
      %s133 = int_to_ptr.vmem [resolvable:$true] %s132
      %s134 = sshll.u32 %s1, 4
      %s135 = int_to_ptr.hbm [resolvable:$true] %s134
      %140 = dma.vmem_to_hbm [thread:$0]  %s133, 256, %s135, [#allocation4], 32, 32, 2
    $region13: #{tpu_custom_call.1} parent=1 // pred_fallthru
      _
    // Predicated region
    $region14: #{tpu_custom_call.1} parent=1 // pred_check
      _
    $region15: #{tpu_custom_call.1} parent=1 // pred_check_branch
      %142 = sbr.rel (0) target = $region17
    $region16: #{tpu_custom_call.1} parent=1 // pred_region
      %144 = dma.done [#allocation4], 256
    $region17: #{tpu_custom_call.1} parent=1 // pred_fallthru
      _
    %145 = vsyncpa [#allocation3], 1
    %146 = vsyncpa [#allocation4], 1

</llo_original>
